<compile_context>
chip_gen: v5e
topology: v5e:2x2
jax: 0.10.0
libtpu: 0.0.40
codegen_flags: <defaults>
</compile_context>

<pallas_src>
import jax
import jax.numpy as jnp
from jax import lax
from jax.experimental import pallas as pl
from jax.experimental.pallas import tpu as pltpu

EPS = 1e-5
LANE = 128
VMEM_LIMIT = 32 * 1024 * 1024   # within the scoped default / physical VMEM of v5e/v6e/v7x


def _round_up(x, m):
    return (x + m - 1) // m * m


def _pick_tile(m, cap=256):
    """Largest row tile <= cap that divides m and is a multiple of 8 (else the full m)."""
    for t in range(min(m, cap), 7, -1):
        if m % t == 0 and t % 8 == 0:
            return t
    return m


# --------------------------- pass 1: conv1 + BN1 statistics ---------------------------

def _conv1_kernel(xcol_ref, w_ref, z_ref, stats_ref):
    """z = xcol @ w (single fused MXU matmul, K = 9*Cin); accumulate per-channel sum/sumsq."""
    z = jnp.dot(xcol_ref[...], w_ref[...], preferred_element_type=jnp.float32)   # (TM, Cp)
    z_ref[...] = z

    @pl.when(pl.program_id(0) == 0)
    def _init():
        stats_ref[...] = jnp.zeros_like(stats_ref)

    upd = jnp.concatenate([jnp.sum(z, axis=0, keepdims=True),
                           jnp.sum(z * z, axis=0, keepdims=True)], axis=0)
    stats_ref[...] = stats_ref[...] + upd


# ------------------- pass 2: BN1+ReLU, conv2 (per image) + BN2 statistics -------------

def _make_conv2_kernel(Hout, Wout, Cp, compute_dtype):
    HW = Hout * Wout

    def kernel(z1_ref, sc_ref, sh_ref, w_ref, z2_ref, stats_ref, ypad_ref):
        n = pl.program_id(0)

        # Zero the whole padded scratch only on the first grid step; later steps rewrite
        # only the interior, so the 1-pixel halo stays zero (O(volume) zero amortized).
        @pl.when(n == 0)
        def _zero():
            ypad_ref[...] = jnp.zeros_like(ypad_ref)

        # BN1 folded to a per-channel scale/shift, ReLU fused.
        y1 = jnp.maximum(z1_ref[0] * sc_ref[...] + sh_ref[...], 0.0)      # (Hout, Wout, Cp)
        ypad_ref[pl.ds(1, Hout), pl.ds(1, Wout), :] = y1

        # conv2 as ONE fused MXU matmul: in-VMEM im2col slab (HW, 9*Cp) in bf16.
        cols = []
        for kh in range(3):
            for kw in range(3):
                tap = ypad_ref[pl.ds(kh, Hout), pl.ds(kw, Wout), :]
                cols.append(tap.reshape(HW, Cp).astype(compute_dtype))
        slab = jnp.concatenate(cols, axis=-1)                             # (HW, 9*Cp)
        z2 = jnp.dot(slab, w_ref[...], preferred_element_type=jnp.float32)  # (HW, Cp)
        z2_ref[0] = z2

        @pl.when(n == 0)
        def _init():
            stats_ref[...] = jnp.zeros_like(stats_ref)

        upd = jnp.concatenate([jnp.sum(z2, axis=0, keepdims=True),
                               jnp.sum(z2 * z2, axis=0, keepdims=True)], axis=0)
        stats_ref[...] = stats_ref[...] + upd

    return kernel


# ------------------- pass 3: BN2 scale/shift + skip connection + final ReLU -----------

def _make_out_kernel(use_1x1conv):
    if use_1x1conv:
        def kernel(z2_ref, xs_ref, w3_ref, b3_ref, sc_ref, sh_ref, out_ref):
            skip = jnp.dot(xs_ref[...], w3_ref[...],
                           preferred_element_type=jnp.float32) + b3_ref[...]
            y = z2_ref[...] * sc_ref[...] + sh_ref[...]
            out_ref[...] = jnp.maximum(y + skip, 0.0)
    else:
        def kernel(z2_ref, xs_ref, sc_ref, sh_ref, out_ref):
            y = z2_ref[...] * sc_ref[...] + sh_ref[...]
            out_ref[...] = jnp.maximum(y + xs_ref[...], 0.0)
    return kernel


# ----------------------------------- wrapper ------------------------------------------

def residual_forward(x_nchw, p, stride, use_1x1conv, compute_dtype=jnp.bfloat16):
    """Pallas implementation of Residual.forward. Input/output in PyTorch NCHW layout."""
    x = jnp.transpose(x_nchw, (0, 2, 3, 1)).astype(jnp.float32)        # NCHW -> NHWC
    N, Hin, Win, Cin = x.shape
    Cout = p['w1'].shape[-1]
    s = stride
    Hout = (Hin + 2 - 3) // s + 1
    Wout = (Win + 2 - 3) // s + 1
    M = N * Hout * Wout
    HW = Hout * Wout
    Cp = _round_up(Cout, LANE)          # lane-dense channel padding (zeros in pad lanes)

    if not use_1x1conv:
        assert Cin == Cout and s == 1, "identity skip requires Cin == Cout and stride == 1"

    # ---------------- wrapper glue (layout / slicing only) ----------------
    xpad = jnp.pad(x, ((0, 0), (1, 1), (1, 1), (0, 0)))                # padding=1
    taps = [xpad[:, kh:kh + s * Hout:s, kw:kw + s * Wout:s, :]
            for kh in range(3) for kw in range(3)]
    xcol = jnp.concatenate(taps, axis=-1).reshape(M, 9 * Cin).astype(compute_dtype)

    xs = x[:, ::s, ::s, :][:, :Hout, :Wout, :].reshape(M, Cin)         # skip-path input

    w1 = p['w1'].astype(compute_dtype).reshape(9 * Cin, Cout)          # HWIO -> (9*Cin, Cout)
    w1p = jnp.zeros((9 * Cin, Cp), compute_dtype).at[:, :Cout].set(w1)
    w2 = p['w2'].astype(compute_dtype)                                 # (3,3,Cout,Cout) HWIO
    w2p = jnp.zeros((3, 3, Cp, Cp), compute_dtype).at[:, :, :Cout, :Cout].set(w2)
    w2p = w2p.reshape(9 * Cp, Cp)

    def padc(v):                                                       # per-channel -> (1, Cp)
        return jnp.zeros((1, Cp), jnp.float32).at[0, :Cout].set(v.astype(jnp.float32))

    g1p, be1p = padc(p['g1']), padc(p['be1'])
    g2p, be2p = padc(p['g2']), padc(p['be2'])
    # NOTE: conv biases b1/b2 are intentionally NOT used: training-mode BN removes any
    # per-channel pre-BN bias exactly.

    TM = _pick_tile(M)
    cparams_red = pltpu.CompilerParams(dimension_semantics=("arbitrary",),
                                       vmem_limit_bytes=VMEM_LIMIT)
    cparams_par = pltpu.CompilerParams(dimension_semantics=("parallel",),
                                       vmem_limit_bytes=VMEM_LIMIT)

    # ---------------- pass 1: conv1 (one fused matmul) + BN1 stats ----------------
    z1, stats1 = pl.pallas_call(
        _conv1_kernel,
        out_shape=(jax.ShapeDtypeStruct((M, Cp), jnp.float32),
                   jax.ShapeDtypeStruct((2, Cp), jnp.float32)),
        grid=(M // TM,),
        in_specs=[pl.BlockSpec((TM, 9 * Cin), lambda i: (i, 0)),
                  pl.BlockSpec((9 * Cin, Cp), lambda i: (0, 0))],
        out_specs=(pl.BlockSpec((TM, Cp), lambda i: (i, 0)),
                   pl.BlockSpec((2, Cp), lambda i: (0, 0))),
        compiler_params=cparams_red,
    )(xcol, w1p)

    def fold_bn(stats, g, b):
        mean = stats[0:1] / M
        var = jnp.maximum(stats[1:2] / M - mean * mean, 0.0)           # guard fp cancellation
        scale = g * lax.rsqrt(var + EPS)
        shift = b - mean * scale
        return scale, shift

    sc1, sh1 = fold_bn(stats1, g1p, be1p)

    # ------------- pass 2: BN1+ReLU, conv2 (one fused matmul per image) + BN2 stats ----
    conv2_kernel = _make_conv2_kernel(Hout, Wout, Cp, compute_dtype)
    z2, stats2 = pl.pallas_call(
        conv2_kernel,
        out_shape=(jax.ShapeDtypeStruct((N, HW, Cp), jnp.float32),
                   jax.ShapeDtypeStruct((2, Cp), jnp.float32)),
        grid=(N,),
        in_specs=[pl.BlockSpec((1, Hout, Wout, Cp), lambda n: (n, 0, 0, 0)),
                  pl.BlockSpec((1, Cp), lambda n: (0, 0)),
                  pl.BlockSpec((1, Cp), lambda n: (0, 0)),
                  pl.BlockSpec((9 * Cp, Cp), lambda n: (0, 0))],
        out_specs=(pl.BlockSpec((1, HW, Cp), lambda n: (n, 0, 0)),
                   pl.BlockSpec((2, Cp), lambda n: (0, 0))),
        scratch_shapes=[pltpu.VMEM((Hout + 2, Wout + 2, Cp), jnp.float32)],
        compiler_params=cparams_red,
    )(z1.reshape(N, Hout, Wout, Cp), sc1, sh1, w2p)

    sc2, sh2 = fold_bn(stats2, g2p, be2p)

    # ---------------- pass 3: BN2 (scale/shift) + skip + residual ReLU ----------------
    out_kernel = _make_out_kernel(use_1x1conv)
    if use_1x1conv:
        w3 = p['w3'].astype(compute_dtype).reshape(Cin, Cout)
        w3p = jnp.zeros((Cin, Cp), compute_dtype).at[:, :Cout].set(w3)
        b3p = padc(p['b3'])
        inputs = (z2.reshape(M, Cp), xs.astype(compute_dtype), w3p, b3p, sc2, sh2)
        in_specs = [pl.BlockSpec((TM, Cp), lambda i: (i, 0)),
                    pl.BlockSpec((TM, Cin), lambda i: (i, 0)),
                    pl.BlockSpec((Cin, Cp), lambda i: (0, 0)),
                    pl.BlockSpec((1, Cp), lambda i: (0, 0)),
                    pl.BlockSpec((1, Cp), lambda i: (0, 0)),
                    pl.BlockSpec((1, Cp), lambda i: (0, 0))]
    else:
        xs_p = jnp.zeros((M, Cp), jnp.float32).at[:, :Cout].set(xs)
        inputs = (z2.reshape(M, Cp), xs_p, sc2, sh2)
        in_specs = [pl.BlockSpec((TM, Cp), lambda i: (i, 0)),
                    pl.BlockSpec((TM, Cp), lambda i: (i, 0)),
                    pl.BlockSpec((1, Cp), lambda i: (0, 0)),
                    pl.BlockSpec((1, Cp), lambda i: (0, 0))]

    out_p = pl.pallas_call(
        out_kernel,
        out_shape=jax.ShapeDtypeStruct((M, Cp), jnp.float32),
        grid=(M // TM,),
        in_specs=in_specs,
        out_specs=pl.BlockSpec((TM, Cp), lambda i: (i, 0)),
        compiler_params=cparams_par,
    )(*inputs)

    out = out_p[:, :Cout].reshape(N, Hout, Wout, Cout)
    return jnp.transpose(out, (0, 3, 1, 2))                            # NHWC -> NCHW


# ---------------- pure-JAX reference (for correctness check) ----------------

def residual_reference(x_nchw, p, stride, use_1x1conv, matmul_dtype=jnp.float32):
    """Reference. matmul_dtype lets the check apply the same bf16 operand quantization as
    the kernel (accumulation stays f32) so the tolerance can stay tight."""
    x = jnp.transpose(x_nchw, (0, 2, 3, 1)).astype(jnp.float32)

    def conv(inp, w, b, s, pad):
        y = lax.conv_general_dilated(
            inp.astype(matmul_dtype), w.astype(matmul_dtype), (s, s),
            ((pad, pad), (pad, pad)),
            dimension_numbers=('NHWC', 'HWIO', 'NHWC'),
            preferred_element_type=jnp.float32)
        return y + b

    def bn(y, g, b):
        mean = jnp.mean(y, axis=(0, 1, 2), keepdims=True)
        var = jnp.mean((y - mean) ** 2, axis=(0, 1, 2), keepdims=True)
        return (y - mean) * lax.rsqrt(var + EPS) * g + b

    y = jax.nn.relu(bn(conv(x, p['w1'], p['b1'], stride, 1), p['g1'], p['be1']))
    y = bn(conv(y, p['w2'], p['b2'], 1, 1), p['g2'], p['be2'])
    skip = conv(x, p['w3'], p['b3'], stride, 0) if use_1x1conv else x
    return jnp.transpose(jax.nn.relu(y + skip), (0, 3, 1, 2))


# ---------------- deterministic parameter init (PyTorch-shaped) ----------------

def init_params(key, cin, cout, use_1x1conv):
    def conv_init(k, kh, kw, ci, co):
        fan_in = ci * kh * kw
        bound = float(fan_in) ** -0.5
        kw_, kb_ = jax.random.split(k)
        w = jax.random.uniform(kw_, (kh, kw, ci, co), jnp.float32, -bound, bound)  # HWIO
        b = jax.random.uniform(kb_, (co,), jnp.float32, -bound, bound)
        return w, b

    k1, k2, k3 = jax.random.split(key, 3)
    p = {}
    p['w1'], p['b1'] = conv_init(k1, 3, 3, cin, cout)
    p['w2'], p['b2'] = conv_init(k2, 3, 3, cout, cout)
    p['g1'] = jnp.ones((cout,), jnp.float32)    # BatchNorm default init: weight=1
    p['be1'] = jnp.zeros((cout,), jnp.float32)  # bias=0
    p['g2'] = jnp.ones((cout,), jnp.float32)
    p['be2'] = jnp.zeros((cout,), jnp.float32)
    if use_1x1conv:
        p['w3'], p['b3'] = conv_init(k3, 1, 1, cin, cout)
    return p


if __name__ == "__main__":
    key = jax.random.PRNGKey(0)
    kx, kpa, kpb = jax.random.split(key, 3)
    x = jax.random.uniform(kx, (2, 4, 16, 16), jnp.float32)   # NCHW, like the PyTorch module

    # Config A: identity skip (in=out=4, stride=1, use_1x1conv=False)
    pA = init_params(kpa, 4, 4, False)
    outA = residual_forward(x, pA, stride=1, use_1x1conv=False)

    # Config B: projection skip (in=4, out=8, stride=2, use_1x1conv=True)
    pB = init_params(kpb, 4, 8, True)
    outB = residual_forward(x, pB, stride=2, use_1x1conv=True)

    jax.block_until_ready((outA, outB))
    assert outA.shape == (2, 4, 16, 16), outA.shape
    assert outB.shape == (2, 8, 8, 8), outB.shape

    # Compare against a reference using the same bf16 matmul-operand quantization.
    refA = residual_reference(x, pA, 1, False, matmul_dtype=jnp.bfloat16)
    refB = residual_reference(x, pB, 2, True, matmul_dtype=jnp.bfloat16)
    errA = float(jnp.max(jnp.abs(outA - refA)))
    errB = float(jnp.max(jnp.abs(outB - refB)))
    assert errA < 5e-3 and errB < 5e-3, (errA, errB)
    print("KERNEL_OK")
</pallas_src>

<mosaic_0001>
module attributes {stable_mosaic.version = 11 : i64} {
  func.func @_conv1_kernel(%arg0: i32, %arg1: memref<256x36xbf16, #tpu.memory_space<vmem>>, %arg2: memref<36x128xbf16, #tpu.memory_space<vmem>>, %arg3: memref<256x128xf32, #tpu.memory_space<vmem>>, %arg4: memref<2x128xf32, #tpu.memory_space<vmem>>) attributes {dimension_semantics = [#tpu.dimension_semantics<arbitrary>], iteration_bounds = array<i64: 2>, scalar_prefetch = 0 : i64, scratch_operands = 0 : i64, tpu.core_type = #tpu.core_type<tc>, window_params = [{transform_indices = @transform_0, window_bounds = array<i64: 256, 36>}, {pipeline_mode = #tpu.pipeline_mode<synchronous>, transform_indices = @transform_1, window_bounds = array<i64: 36, 128>}, {transform_indices = @transform_2, window_bounds = array<i64: 256, 128>}, {pipeline_mode = #tpu.pipeline_mode<synchronous>, transform_indices = @transform_3, window_bounds = array<i64: 2, 128>}]} {
    %c0 = arith.constant 0 : index
    %c0_0 = arith.constant 0 : index
    %0 = vector.load %arg1[%c0, %c0_0] : memref<256x36xbf16, #tpu.memory_space<vmem>>, vector<256x36xbf16>
    %c0_1 = arith.constant 0 : index
    %c0_2 = arith.constant 0 : index
    %1 = vector.load %arg2[%c0_1, %c0_2] : memref<36x128xbf16, #tpu.memory_space<vmem>>, vector<36x128xbf16>
    %cst = arith.constant dense<0.000000e+00> : vector<256x128xf32>
    %2 = tpu.matmul %0, %1, %cst {dimension_numbers = #tpu.dot_dimension_numbers<[1], [0], [0], [1], [0, 0, 1, 1], [], []>} : vector<256x36xbf16>, vector<36x128xbf16>, vector<256x128xf32> -> vector<256x128xf32>
    %c0_3 = arith.constant 0 : index
    %c0_4 = arith.constant 0 : index
    %3 = vector.load %arg3[%c0_3, %c0_4] : memref<256x128xf32, #tpu.memory_space<vmem>>, vector<256x128xf32>
    tpu.vector_store %arg3[%c0_3, %c0_4], %2 {strides = array<i32>} : memref<256x128xf32, #tpu.memory_space<vmem>>, vector<256x128xf32>,
    %c0_i32 = arith.constant 0 : i32
    %4 = arith.cmpi eq, %arg0, %c0_i32 : i32
    %5 = arith.extui %4 : i1 to i32
    %c0_i32_5 = arith.constant 0 : i32
    %6 = arith.cmpi ne, %5, %c0_i32_5 : i32
    scf.if %6 {
      %cst_12 = arith.constant 0.000000e+00 : f32
      %16 = vector.broadcast %cst_12 : f32 to vector<2x128xf32>
      %c0_13 = arith.constant 0 : index
      %c0_14 = arith.constant 0 : index
      %17 = vector.load %arg4[%c0_13, %c0_14] : memref<2x128xf32, #tpu.memory_space<vmem>>, vector<2x128xf32>
      tpu.vector_store %arg4[%c0_13, %c0_14], %16 {strides = array<i32>} : memref<2x128xf32, #tpu.memory_space<vmem>>, vector<2x128xf32>,
    } else {
    }
    %cst_6 = arith.constant dense<0.000000e+00> : vector<128xf32>
    %7 = vector.multi_reduction <add>, %2, %cst_6 [0] : vector<256x128xf32> to vector<128xf32>
    %8 = vector.shape_cast %7 : vector<128xf32> to vector<1x128xf32>
    %9 = arith.mulf %2, %2 : vector<256x128xf32>
    %cst_7 = arith.constant dense<0.000000e+00> : vector<128xf32>
    %10 = vector.multi_reduction <add>, %9, %cst_7 [0] : vector<256x128xf32> to vector<128xf32>
    %11 = vector.shape_cast %10 : vector<128xf32> to vector<1x128xf32>
    %12 = tpu.concatenate %8, %11 in 0 : vector<1x128xf32>, vector<1x128xf32> -> vector<2x128xf32>
    %c0_8 = arith.constant 0 : index
    %c0_9 = arith.constant 0 : index
    %13 = vector.load %arg4[%c0_8, %c0_9] : memref<2x128xf32, #tpu.memory_space<vmem>>, vector<2x128xf32>
    %14 = arith.addf %13, %12 : vector<2x128xf32>
    %c0_10 = arith.constant 0 : index
    %c0_11 = arith.constant 0 : index
    %15 = vector.load %arg4[%c0_10, %c0_11] : memref<2x128xf32, #tpu.memory_space<vmem>>, vector<2x128xf32>
    tpu.vector_store %arg4[%c0_10, %c0_11], %14 {strides = array<i32>} : memref<2x128xf32, #tpu.memory_space<vmem>>, vector<2x128xf32>,
    return
  }
  func.func @transform_0(%arg0: i32) -> (i32, i32) {
    %c0_i32 = arith.constant 0 : i32
    %c0_i32_0 = arith.constant 0 : i32
    return %arg0, %c0_i32 : i32, i32
  }
  func.func @transform_1(%arg0: i32) -> (i32, i32) {
    %c0_i32 = arith.constant 0 : i32
    %c0_i32_0 = arith.constant 0 : i32
    %c0_i32_1 = arith.constant 0 : i32
    return %c0_i32, %c0_i32_0 : i32, i32
  }
  func.func @transform_2(%arg0: i32) -> (i32, i32) {
    %c0_i32 = arith.constant 0 : i32
    %c0_i32_0 = arith.constant 0 : i32
    return %arg0, %c0_i32 : i32, i32
  }
  func.func @transform_3(%arg0: i32) -> (i32, i32) {
    %c0_i32 = arith.constant 0 : i32
    %c0_i32_0 = arith.constant 0 : i32
    %c0_i32_1 = arith.constant 0 : i32
    return %c0_i32, %c0_i32_0 : i32, i32
  }
}

</mosaic_0001>

<llo_original>
// kernel: tpu_custom_call.1
$region0: #{tpu_custom_call.1}
  #allocation0 [shape = 'u32[]', space=smem, size = 0x4, offset = 0x4, fixed_abs, tag = 'smem constant byte address 0x4 - core index']
  #allocation1 [shape = 'u32[72,128]{1,0:T(1,128)}', space=vmem, size = 0x9000, scoped, tag = 'internal scratch']
  %s0 = inlined_call_operand.vmem [shape: bf16[512,36], index: 0, kind: input, shape index: {}]
  %s1 = inlined_call_operand.vmem [shape: bf16[36,128], index: 1, kind: input, shape index: {}]
  %s2 = inlined_call_operand.hbm [shape: f32[512,128], index: 2, kind: output, shape index: {0}]
  %s3 = inlined_call_operand.hbm [shape: f32[2,128], index: 3, kind: output, shape index: {1}]
  %4 = xla_tuple %s2, %s3
  %s5 = sld [smem:[#allocation0]]
  $region53: #{tpu_custom_call.1} parent=0
    _
  %s7 = ssub.s32 1, %s5
  %s8 = scalar_select 0, %s7, %s5
  $region1: #{tpu_custom_call.1} parent=0
    #allocation2 [shape = 'u8[262144]{0}', space=vmem, size = 0x40000, scoped, tag = 'output window, operand 0']
    #allocation3 [shape = 's32[2]{0}', space=sflag, size = 0x8, scoped, tag = 'scoped memory for tpu_custom_call.1']
    #allocation4 [shape = 'u8[1024]{0}', space=vmem, size = 0x400, scoped, tag = 'output window, operand 1, single buffered']
    #allocation5 [shape = 's32[1]{0}', space=sflag, size = 0x4, scoped, tag = 'scoped memory for tpu_custom_call.1']
    %9 = vsyncpa [#allocation3], 0
    %s10 = scalar_lea.sflag [#allocation3], 1
    %11 = vsyncpa %s10, 0
    %12 = vsyncpa [#allocation5], 0
    loop: start=0, step=1, limit=4
    $region2: #{tpu_custom_call.1} parent=1 // loop_pre_header
      _
    $region3: #{tpu_custom_call.1} parent=1 // loop_header
      %s14 = sphi 0, %s18
      %p15 = scmp.ge.s32.totalorder %s14, 4
      %s24 = sphi 0, %s26
      %s27 = sphi 0, %s24
      %s28 = sphi 0, %s27
      %s44 = sphi 0, %s28
      %s48 = sphi 0, %s48
      %s50 = sphi 0, %s48
      %s51 = sphi 0, %s50
      %s65 = sphi 0, %s51
      %s71 = sphi 0, %s73
      %s74 = sphi 0, %s71
      %s75 = sphi 0, %s74
      %s91 = sphi 0, %s75
      %s95 = sphi 0, %s95
      %s97 = sphi 0, %s95
      %s98 = sphi 0, %s97
      %s112 = sphi 0, %s98
    $region4: #{tpu_custom_call.1} parent=1 // loop_header_branch
      %17 = sbr.rel (%p15) target = $region8
    $region5: #{tpu_custom_call.1} parent=1 // loop_body
      %s19 = ssub.s32 %s14, 1
      %s20 = ssub.s32 %s14, 2
      %s21 = sadd.s32 %s14, 1
      %s22 = ssub.s32 %s14, %s21
      %p23 = scmp.eq.s32.totalorder %s22, 0
      %s25 = sadd.s32 %s24, 1
      %s26 = scalar_select %p23, %s24, %s25
      %p29 = pneg %p23
      %p30 = scmp.eq.s32.totalorder %s14, 1
      %p31 = por %p29, %p30
      %p32 = scmp.ne.s32.totalorder %s24, %s27
      %p33 = scmp.eq.s32.totalorder %s14, 0
      %p34 = por %p32, %p33
      %p35 = scmp.ne.s32.totalorder %s24, %s27
      %p36 = scmp.eq.s32.totalorder %s19, 1
      %p37 = por %p35, %p36
      %p38 = scmp.ne.s32.totalorder %s27, %s28
      %p39 = scmp.eq.s32.totalorder %s19, 0
      %p40 = por %p38, %p39
      %p41 = scmp.ne.s32.totalorder %s27, %s28
      %p42 = scmp.eq.s32.totalorder %s20, 1
      %p43 = por %p41, %p42
      %p45 = scmp.ne.s32.totalorder %s28, %s44
      %p46 = scmp.eq.s32.totalorder %s20, 0
      %p47 = por %p45, %p46
      %s49 = sadd.s32 %s48, 1
      %p52 = scmp.eq.s32.totalorder %s14, 1
      %p53 = scmp.ne.s32.totalorder %s48, %s50
      %p54 = scmp.eq.s32.totalorder %s14, 0
      %p55 = por %p53, %p54
      %p56 = scmp.ne.s32.totalorder %s48, %s50
      %p57 = scmp.eq.s32.totalorder %s19, 1
      %p58 = por %p56, %p57
      %p59 = scmp.ne.s32.totalorder %s50, %s51
      %p60 = scmp.eq.s32.totalorder %s19, 0
      %p61 = por %p59, %p60
      %p62 = scmp.ne.s32.totalorder %s50, %s51
      %p63 = scmp.eq.s32.totalorder %s20, 1
      %p64 = por %p62, %p63
      %p66 = scmp.ne.s32.totalorder %s51, %s65
      %p67 = scmp.eq.s32.totalorder %s20, 0
      %p68 = por %p66, %p67
      %s69 = ssub.s32 %s14, %s21
      %p70 = scmp.eq.s32.totalorder %s69, 0
      %s72 = sadd.s32 %s71, 1
      %s73 = scalar_select %p70, %s71, %s72
      %p76 = pneg %p70
      %p77 = scmp.eq.s32.totalorder %s14, 1
      %p78 = por %p76, %p77
      %p79 = scmp.ne.s32.totalorder %s71, %s74
      %p80 = scmp.eq.s32.totalorder %s14, 0
      %p81 = por %p79, %p80
      %p82 = scmp.ne.s32.totalorder %s71, %s74
      %p83 = scmp.eq.s32.totalorder %s19, 1
      %p84 = por %p82, %p83
      %p85 = scmp.ne.s32.totalorder %s74, %s75
      %p86 = scmp.eq.s32.totalorder %s19, 0
      %p87 = por %p85, %p86
      %p88 = scmp.ne.s32.totalorder %s74, %s75
      %p89 = scmp.eq.s32.totalorder %s20, 1
      %p90 = por %p88, %p89
      %p92 = scmp.ne.s32.totalorder %s75, %s91
      %p93 = scmp.eq.s32.totalorder %s20, 0
      %p94 = por %p92, %p93
      %s96 = sadd.s32 %s95, 1
      %p99 = scmp.eq.s32.totalorder %s14, 1
      %p100 = scmp.ne.s32.totalorder %s95, %s97
      %p101 = scmp.eq.s32.totalorder %s14, 0
      %p102 = por %p100, %p101
      %p103 = scmp.ne.s32.totalorder %s95, %s97
      %p104 = scmp.eq.s32.totalorder %s19, 1
      %p105 = por %p103, %p104
      %p106 = scmp.ne.s32.totalorder %s97, %s98
      %p107 = scmp.eq.s32.totalorder %s19, 0
      %p108 = por %p106, %p107
      %p109 = scmp.ne.s32.totalorder %s97, %s98
      %p110 = scmp.eq.s32.totalorder %s20, 1
      %p111 = por %p109, %p110
      %p113 = scmp.ne.s32.totalorder %s98, %s112
      %p114 = scmp.eq.s32.totalorder %s20, 0
      %p115 = por %p113, %p114
      %p116 = scmp.le.s32.totalorder 1, %s14
      %p117 = scmp.lt.s32.totalorder %s14, 3
      %p118 = pnand %p116, %p117
      %p119 = pneg %p118
      // Predicated region
      $region9: #{tpu_custom_call.1} parent=5 // pred_check
        _
      $region10: #{tpu_custom_call.1} parent=5 // pred_check_branch
        %121 = sbr.rel (%p118) target = $region12
      $region11: #{tpu_custom_call.1} parent=5 // pred_region
        %s122 = ssub.s32 %s14, 1
        // Predicated region
        $region13: #{tpu_custom_call.1} parent=11 // pred_check
          %p123 = pneg %p61
        $region14: #{tpu_custom_call.1} parent=11 // pred_check_branch
          %125 = sbr.rel (%p123) target = $region16
        $region15: #{tpu_custom_call.1} parent=11 // pred_region
          _
        $region16: #{tpu_custom_call.1} parent=11 // pred_fallthru
          _
      $region12: #{tpu_custom_call.1} parent=5 // pred_fallthru
        _
      %p126 = scmp.lt.s32.totalorder %s14, 2
      // Predicated region
      $region17: #{tpu_custom_call.1} parent=5 // pred_check
        %p127 = pneg %p126
      $region18: #{tpu_custom_call.1} parent=5 // pred_check_branch
        %129 = sbr.rel (%p127) target = $region20
      $region19: #{tpu_custom_call.1} parent=5 // pred_region
        // Predicated region
        $region21: #{tpu_custom_call.1} parent=19 // pred_check
          %p130 = pneg %p34
        $region22: #{tpu_custom_call.1} parent=19 // pred_check_branch
          %132 = sbr.rel (%p130) target = $region24
        $region23: #{tpu_custom_call.1} parent=19 // pred_region
          %s133 = smul.u32 32, %s14
          %p134 = scmp.lt.s32.totalorder %s133, 63
          %s135 = scalar_select %p134, %s133, 63
          %s136 = smul.addr %s135, 4
          %s137 = scalar_lea.vmem %s0, %s136
          %s138 = smul.u32 32, %s14
        $region24: #{tpu_custom_call.1} parent=19 // pred_fallthru
          _
      $region20: #{tpu_custom_call.1} parent=5 // pred_fallthru
        _
      %p139 = scmp.le.s32.totalorder 1, %s14
      %p140 = scmp.lt.s32.totalorder %s14, 3
      %p141 = pnand %p139, %p140
      %p142 = pneg %p141
      // Predicated region
      $region25: #{tpu_custom_call.1} parent=5 // pred_check
        _
      $region26: #{tpu_custom_call.1} parent=5 // pred_check_branch
        %144 = sbr.rel (%p141) target = $region28
      $region27: #{tpu_custom_call.1} parent=5 // pred_region
        %s145 = ssub.s32 %s14, 1
        %s146 = smul.u32 32, %s19
        %p147 = scmp.lt.s32.totalorder %s146, 63
        %s148 = scalar_select %p147, %s146, 63
        %s149 = smul.addr %s148, 4
        %s150 = scalar_lea.vmem %s0, %s149
        %p151 = pneg %p40
        %p152 = pneg %p37
        %p153 = pneg %p61
        %p154 = pneg %p58
        %p155 = pneg %p87
        %p156 = pneg %p84
        %s157 = sand.u32 %s74, 1
        %s158 = scalar_lea.sflag [#allocation3], %s157
        %s159 = sand.u32 %s74, 1
        %s160 = smul.addr %s159, 256
        %s161 = scalar_lea.vmem [#allocation2], %s160
        %p162 = pneg %p108
        %p163 = pneg %p105
        %s164 = smul.u32 32, %s19
        %p165 = scmp.lt.s32.totalorder %s164, 63
        %s166 = scalar_select %p165, %s164, 63
        %s167 = smul.addr %s166, 4
        %s168 = scalar_lea.vmem %s0, %s167
        %s169 = smul.u32 32, %s19
        %s170 = smul.u32 32, %s19
        %v172 = vld [vmem:[%s168] sm:$0xf]
        %v173 = vld [vmem:[%s168 + $0x4] sm:$0xf]
        %v174 = vld [vmem:[%s168 + $0x8] sm:$0xf]
        %v175 = vld [vmem:[%s168 + $0xc] sm:$0xf]
        %v176 = vld [vmem:[%s168 + $0x10] sm:$0xf]
        %v177 = vld [vmem:[%s168 + $0x14] sm:$0xf]
        %v178 = vld [vmem:[%s168 + $0x18] sm:$0xf]
        %v179 = vld [vmem:[%s168 + $0x1c] sm:$0xf]
        %v180 = vld [vmem:[%s168 + $0x20] sm:$0xf]
        %v181 = vld [vmem:[%s168 + $0x24] sm:$0xf]
        %v182 = vld [vmem:[%s168 + $0x28] sm:$0xf]
        %v183 = vld [vmem:[%s168 + $0x2c] sm:$0xf]
        %v184 = vld [vmem:[%s168 + $0x30] sm:$0xf]
        %v185 = vld [vmem:[%s168 + $0x34] sm:$0xf]
        %v186 = vld [vmem:[%s168 + $0x38] sm:$0xf]
        %v187 = vld [vmem:[%s168 + $0x3c] sm:$0xf]
        %v188 = vld [vmem:[%s168 + $0x40] sm:$0xf]
        %v189 = vld [vmem:[%s168 + $0x44] sm:$0xf]
        %v190 = vld [vmem:[%s168 + $0x48] sm:$0xf]
        %v191 = vld [vmem:[%s168 + $0x4c] sm:$0xf]
        %v192 = vld [vmem:[%s168 + $0x50] sm:$0xf]
        %v193 = vld [vmem:[%s168 + $0x54] sm:$0xf]
        %v194 = vld [vmem:[%s168 + $0x58] sm:$0xf]
        %v195 = vld [vmem:[%s168 + $0x5c] sm:$0xf]
        %v196 = vld [vmem:[%s168 + $0x60] sm:$0xf]
        %v197 = vld [vmem:[%s168 + $0x64] sm:$0xf]
        %v198 = vld [vmem:[%s168 + $0x68] sm:$0xf]
        %v199 = vld [vmem:[%s168 + $0x6c] sm:$0xf]
        %v200 = vld [vmem:[%s168 + $0x70] sm:$0xf]
        %v201 = vld [vmem:[%s168 + $0x74] sm:$0xf]
        %v202 = vld [vmem:[%s168 + $0x78] sm:$0xf]
        %v203 = vld [vmem:[%s168 + $0x7c] sm:$0xf]
        %v204 = vld [vmem:[%s1] sm:$0xf]
        %v205 = vld [vmem:[%s1 + $0x4] sm:$0xf]
        %v206 = vld [vmem:[%s1 + $0x8] sm:$0xf]
        %v207 = vld [vmem:[%s1 + $0xc] sm:$0xf]
        %v208 = vld [vmem:[%s1 + $0x10] sm:$0x3]
        %v241 = vunpack.c.l.b16 %v172
        %v242 = vunpack.c.l.b16 %v173
        %v243 = vunpack.c.l.b16 %v174
        %v244 = vunpack.c.l.b16 %v175
        %v245 = vunpack.c.l.b16 %v176
        %v246 = vunpack.c.l.b16 %v177
        %v247 = vunpack.c.l.b16 %v178
        %v248 = vunpack.c.l.b16 %v179
        %v249 = vunpack.c.l.b16 %v180
        %v250 = vunpack.c.l.b16 %v181
        %v251 = vunpack.c.l.b16 %v182
        %v252 = vunpack.c.l.b16 %v183
        %v253 = vunpack.c.l.b16 %v184
        %v254 = vunpack.c.l.b16 %v185
        %v255 = vunpack.c.l.b16 %v186
        %v256 = vunpack.c.l.b16 %v187
        %v257 = vunpack.c.l.b16 %v188
        %v258 = vunpack.c.l.b16 %v189
        %v259 = vunpack.c.l.b16 %v190
        %v260 = vunpack.c.l.b16 %v191
        %v261 = vunpack.c.l.b16 %v192
        %v262 = vunpack.c.l.b16 %v193
        %v263 = vunpack.c.l.b16 %v194
        %v264 = vunpack.c.l.b16 %v195
        %v265 = vunpack.c.l.b16 %v196
        %v266 = vunpack.c.l.b16 %v197
        %v267 = vunpack.c.l.b16 %v198
        %v268 = vunpack.c.l.b16 %v199
        %v269 = vunpack.c.l.b16 %v200
        %v270 = vunpack.c.l.b16 %v201
        %v271 = vunpack.c.l.b16 %v202
        %v272 = vunpack.c.l.b16 %v203
        %v273 = vpack.c.b16 %v242, %v241
        %v274 = vpack.c.b16 %v244, %v243
        %v275 = vpack.c.b16 %v246, %v245
        %v276 = vpack.c.b16 %v248, %v247
        %v277 = vpack.c.b16 %v250, %v249
        %v278 = vpack.c.b16 %v252, %v251
        %v279 = vpack.c.b16 %v254, %v253
        %v280 = vpack.c.b16 %v256, %v255
        %v281 = vpack.c.b16 %v258, %v257
        %v282 = vpack.c.b16 %v260, %v259
        %v283 = vpack.c.b16 %v262, %v261
        %v284 = vpack.c.b16 %v264, %v263
        %v285 = vpack.c.b16 %v266, %v265
        %v286 = vpack.c.b16 %v268, %v267
        %v287 = vpack.c.b16 %v270, %v269
        %v288 = vpack.c.b16 %v272, %v271
        %v294 = vunpack.c.l.b16 %v204
        %v295 = vunpack.c.l.b16 %v205
        %v296 = vunpack.c.l.b16 %v206
        %v297 = vunpack.c.l.b16 %v207
        %v298 = vunpack.c.l.b16 %v208
        %v299 = vpack.c.b16 %v295, %v294
        %v300 = vpack.c.b16 %v297, %v296
        %v301 = vpack.c.b16 %v298, %v298
        %vm304 = vcmask 293888
        %v306 = vsel %vm304, %v273, 0
        %v309 = vsel %vm304, %v274, 0
        %v312 = vsel %vm304, %v275, 0
        %v315 = vsel %vm304, %v276, 0
        %v318 = vsel %vm304, %v277, 0
        %v321 = vsel %vm304, %v278, 0
        %v324 = vsel %vm304, %v279, 0
        %v327 = vsel %vm304, %v280, 0
        %v330 = vsel %vm304, %v281, 0
        %v333 = vsel %vm304, %v282, 0
        %v336 = vsel %vm304, %v283, 0
        %v339 = vsel %vm304, %v284, 0
        %v342 = vsel %vm304, %v285, 0
        %v345 = vsel %vm304, %v286, 0
        %v348 = vsel %vm304, %v287, 0
        %v351 = vsel %vm304, %v288, 0
        %vm353 = vcmask 1041408
        %v355 = vsel %vm353, %v301, 0
        %357 = vmatpush.bf16.msra.mxu0 0
        %358 = vmatpush.bf16.msra.mxu0 0
        %359 = vmatpush.bf16.msra.mxu0 0
        %360 = vmatpush.bf16.msra.mxu0 0
        %361 = vmatpush.bf16.msra.mxu0 0
        %362 = vmatpush.bf16.msra.mxu0 %v355
        %363 = vmatpush.bf16.msra.mxu0 %v300
        %364 = vmatpush.bf16.msra.mxu0 %v299
        %365 = vmatmul.bf16.gmra.mxu0 %v306
        %v366 = vpop.f32.mrf.mxu0
        %v367 = vadd.f32 0.0, %v366
        %v368 = vpop.f32.mrf.mxu0
        %v369 = vadd.f32 0.0, %v368
        %370 = vmatmul.bf16.gmra.mxu0 %v309
        %v371 = vpop.f32.mrf.mxu0
        %v372 = vadd.f32 0.0, %v371
        %v373 = vpop.f32.mrf.mxu0
        %v374 = vadd.f32 0.0, %v373
        %375 = vmatmul.bf16.gmra.mxu0 %v312
        %v376 = vpop.f32.mrf.mxu0
        %v377 = vadd.f32 0.0, %v376
        %v378 = vpop.f32.mrf.mxu0
        %v379 = vadd.f32 0.0, %v378
        %380 = vmatmul.bf16.gmra.mxu0 %v315
        %v381 = vpop.f32.mrf.mxu0
        %v382 = vadd.f32 0.0, %v381
        %v383 = vpop.f32.mrf.mxu0
        %v384 = vadd.f32 0.0, %v383
        %385 = vmatmul.bf16.gmra.mxu0 %v318
        %v386 = vpop.f32.mrf.mxu0
        %v387 = vadd.f32 0.0, %v386
        %v388 = vpop.f32.mrf.mxu0
        %v389 = vadd.f32 0.0, %v388
        %390 = vmatmul.bf16.gmra.mxu0 %v321
        %v391 = vpop.f32.mrf.mxu0
        %v392 = vadd.f32 0.0, %v391
        %v393 = vpop.f32.mrf.mxu0
        %v394 = vadd.f32 0.0, %v393
        %395 = vmatmul.bf16.gmra.mxu0 %v324
        %v396 = vpop.f32.mrf.mxu0
        %v397 = vadd.f32 0.0, %v396
        %v398 = vpop.f32.mrf.mxu0
        %v399 = vadd.f32 0.0, %v398
        %400 = vmatmul.bf16.gmra.mxu0 %v327
        %v401 = vpop.f32.mrf.mxu0
        %v402 = vadd.f32 0.0, %v401
        %v403 = vpop.f32.mrf.mxu0
        %v404 = vadd.f32 0.0, %v403
        %405 = vmatmul.bf16.gmra.mxu0 %v330
        %v406 = vpop.f32.mrf.mxu0
        %v407 = vadd.f32 0.0, %v406
        %v408 = vpop.f32.mrf.mxu0
        %v409 = vadd.f32 0.0, %v408
        %410 = vmatmul.bf16.gmra.mxu0 %v333
        %v411 = vpop.f32.mrf.mxu0
        %v412 = vadd.f32 0.0, %v411
        %v413 = vpop.f32.mrf.mxu0
        %v414 = vadd.f32 0.0, %v413
        %415 = vmatmul.bf16.gmra.mxu0 %v336
        %v416 = vpop.f32.mrf.mxu0
        %v417 = vadd.f32 0.0, %v416
        %v418 = vpop.f32.mrf.mxu0
        %v419 = vadd.f32 0.0, %v418
        %420 = vmatmul.bf16.gmra.mxu0 %v339
        %v421 = vpop.f32.mrf.mxu0
        %v422 = vadd.f32 0.0, %v421
        %v423 = vpop.f32.mrf.mxu0
        %v424 = vadd.f32 0.0, %v423
        %425 = vmatmul.bf16.gmra.mxu0 %v342
        %v426 = vpop.f32.mrf.mxu0
        %v427 = vadd.f32 0.0, %v426
        %v428 = vpop.f32.mrf.mxu0
        %v429 = vadd.f32 0.0, %v428
        %430 = vmatmul.bf16.gmra.mxu0 %v345
        %v431 = vpop.f32.mrf.mxu0
        %v432 = vadd.f32 0.0, %v431
        %v433 = vpop.f32.mrf.mxu0
        %v434 = vadd.f32 0.0, %v433
        %435 = vmatmul.bf16.gmra.mxu0 %v348
        %v436 = vpop.f32.mrf.mxu0
        %v437 = vadd.f32 0.0, %v436
        %v438 = vpop.f32.mrf.mxu0
        %v439 = vadd.f32 0.0, %v438
        %440 = vmatmul.bf16.gmra.mxu0 %v351
        %v441 = vpop.f32.mrf.mxu0
        %v442 = vadd.f32 0.0, %v441
        %v443 = vpop.f32.mrf.mxu0
        %v444 = vadd.f32 0.0, %v443
        %445 = vdwg.mxu0
        %446 = vst [vmem:[%s161] sm:$0xff] %v367
        %447 = vst [vmem:[%s161 + $0x8] sm:$0xff] %v369
        %448 = vst [vmem:[%s161 + $0x10] sm:$0xff] %v372
        %449 = vst [vmem:[%s161 + $0x18] sm:$0xff] %v374
        %450 = vst [vmem:[%s161 + $0x20] sm:$0xff] %v377
        %451 = vst [vmem:[%s161 + $0x28] sm:$0xff] %v379
        %452 = vst [vmem:[%s161 + $0x30] sm:$0xff] %v382
        %453 = vst [vmem:[%s161 + $0x38] sm:$0xff] %v384
        %454 = vst [vmem:[%s161 + $0x40] sm:$0xff] %v387
        %455 = vst [vmem:[%s161 + $0x48] sm:$0xff] %v389
        %456 = vst [vmem:[%s161 + $0x50] sm:$0xff] %v392
        %457 = vst [vmem:[%s161 + $0x58] sm:$0xff] %v394
        %458 = vst [vmem:[%s161 + $0x60] sm:$0xff] %v397
        %459 = vst [vmem:[%s161 + $0x68] sm:$0xff] %v399
        %460 = vst [vmem:[%s161 + $0x70] sm:$0xff] %v402
        %461 = vst [vmem:[%s161 + $0x78] sm:$0xff] %v404
        %462 = vst [vmem:[%s161 + $0x80] sm:$0xff] %v407
        %463 = vst [vmem:[%s161 + $0x88] sm:$0xff] %v409
        %464 = vst [vmem:[%s161 + $0x90] sm:$0xff] %v412
        %465 = vst [vmem:[%s161 + $0x98] sm:$0xff] %v414
        %466 = vst [vmem:[%s161 + $0xa0] sm:$0xff] %v417
        %467 = vst [vmem:[%s161 + $0xa8] sm:$0xff] %v419
        %468 = vst [vmem:[%s161 + $0xb0] sm:$0xff] %v422
        %469 = vst [vmem:[%s161 + $0xb8] sm:$0xff] %v424
        %470 = vst [vmem:[%s161 + $0xc0] sm:$0xff] %v427
        %471 = vst [vmem:[%s161 + $0xc8] sm:$0xff] %v429
        %472 = vst [vmem:[%s161 + $0xd0] sm:$0xff] %v432
        %473 = vst [vmem:[%s161 + $0xd8] sm:$0xff] %v434
        %474 = vst [vmem:[%s161 + $0xe0] sm:$0xff] %v437
        %475 = vst [vmem:[%s161 + $0xe8] sm:$0xff] %v439
        %476 = vst [vmem:[%s161 + $0xf0] sm:$0xff] %v442
        %477 = vst [vmem:[%s161 + $0xf8] sm:$0xff] %v444
        %p478 = scmp.eq.s32.totalorder %s19, 0
        // Predicated region
        $region29: #{tpu_custom_call.1} parent=27 // pred_check
          %p479 = pneg %p478
        $region30: #{tpu_custom_call.1} parent=27 // pred_check_branch
          %481 = sbr.rel (%p479) target = $region32
        $region31: #{tpu_custom_call.1} parent=27 // pred_region
          %482 = vst [vmem:[#allocation4] sm:$0x3] 0.0
        $region32: #{tpu_custom_call.1} parent=27 // pred_fallthru
          _
        %v483 = vadd.f32 %v367, %v369
        %v484 = vadd.f32 %v483, %v372
        %v485 = vadd.f32 %v484, %v374
        %v486 = vadd.f32 %v485, %v377
        %v487 = vadd.f32 %v486, %v379
        %v488 = vadd.f32 %v487, %v382
        %v489 = vadd.f32 %v488, %v384
        %v490 = vadd.f32 %v489, %v387
        %v491 = vadd.f32 %v490, %v389
        %v492 = vadd.f32 %v491, %v392
        %v493 = vadd.f32 %v492, %v394
        %v494 = vadd.f32 %v493, %v397
        %v495 = vadd.f32 %v494, %v399
        %v496 = vadd.f32 %v495, %v402
        %v497 = vadd.f32 %v496, %v404
        %v498 = vadd.f32 %v497, %v407
        %v499 = vadd.f32 %v498, %v409
        %v500 = vadd.f32 %v499, %v412
        %v501 = vadd.f32 %v500, %v414
        %v502 = vadd.f32 %v501, %v417
        %v503 = vadd.f32 %v502, %v419
        %v504 = vadd.f32 %v503, %v422
        %v505 = vadd.f32 %v504, %v424
        %v506 = vadd.f32 %v505, %v427
        %v507 = vadd.f32 %v506, %v429
        %v508 = vadd.f32 %v507, %v432
        %v509 = vadd.f32 %v508, %v434
        %v510 = vadd.f32 %v509, %v437
        %v511 = vadd.f32 %v510, %v439
        %v512 = vadd.f32 %v511, %v442
        %v513 = vadd.f32 %v512, %v444
        %v514 = vrot.slane %v513, 4
        %v515 = vadd.f32 %v513, %v514
        %v516 = vrot.slane %v515, 2
        %v517 = vadd.f32 %v515, %v516
        %v518 = vrot.slane %v517, 1
        %v519 = vadd.f32 %v517, %v518
        %v520 = vmul.f32 %v367, %v367
        %v521 = vmul.f32 %v369, %v369
        %v522 = vmul.f32 %v372, %v372
        %v523 = vmul.f32 %v374, %v374
        %v524 = vmul.f32 %v377, %v377
        %v525 = vmul.f32 %v379, %v379
        %v526 = vmul.f32 %v382, %v382
        %v527 = vmul.f32 %v384, %v384
        %v528 = vmul.f32 %v387, %v387
        %v529 = vmul.f32 %v389, %v389
        %v530 = vmul.f32 %v392, %v392
        %v531 = vmul.f32 %v394, %v394
        %v532 = vmul.f32 %v397, %v397
        %v533 = vmul.f32 %v399, %v399
        %v534 = vmul.f32 %v402, %v402
        %v535 = vmul.f32 %v404, %v404
        %v536 = vmul.f32 %v407, %v407
        %v537 = vmul.f32 %v409, %v409
        %v538 = vmul.f32 %v412, %v412
        %v539 = vmul.f32 %v414, %v414
        %v540 = vmul.f32 %v417, %v417
        %v541 = vmul.f32 %v419, %v419
        %v542 = vmul.f32 %v422, %v422
        %v543 = vmul.f32 %v424, %v424
        %v544 = vmul.f32 %v427, %v427
        %v545 = vmul.f32 %v429, %v429
        %v546 = vmul.f32 %v432, %v432
        %v547 = vmul.f32 %v434, %v434
        %v548 = vmul.f32 %v437, %v437
        %v549 = vmul.f32 %v439, %v439
        %v550 = vmul.f32 %v442, %v442
        %v551 = vmul.f32 %v444, %v444
        %v552 = vadd.f32 %v520, %v521
        %v553 = vadd.f32 %v552, %v522
        %v554 = vadd.f32 %v553, %v523
        %v555 = vadd.f32 %v554, %v524
        %v556 = vadd.f32 %v555, %v525
        %v557 = vadd.f32 %v556, %v526
        %v558 = vadd.f32 %v557, %v527
        %v559 = vadd.f32 %v558, %v528
        %v560 = vadd.f32 %v559, %v529
        %v561 = vadd.f32 %v560, %v530
        %v562 = vadd.f32 %v561, %v531
        %v563 = vadd.f32 %v562, %v532
        %v564 = vadd.f32 %v563, %v533
        %v565 = vadd.f32 %v564, %v534
        %v566 = vadd.f32 %v565, %v535
        %v567 = vadd.f32 %v566, %v536
        %v568 = vadd.f32 %v567, %v537
        %v569 = vadd.f32 %v568, %v538
        %v570 = vadd.f32 %v569, %v539
        %v571 = vadd.f32 %v570, %v540
        %v572 = vadd.f32 %v571, %v541
        %v573 = vadd.f32 %v572, %v542
        %v574 = vadd.f32 %v573, %v543
        %v575 = vadd.f32 %v574, %v544
        %v576 = vadd.f32 %v575, %v545
        %v577 = vadd.f32 %v576, %v546
        %v578 = vadd.f32 %v577, %v547
        %v579 = vadd.f32 %v578, %v548
        %v580 = vadd.f32 %v579, %v549
        %v581 = vadd.f32 %v580, %v550
        %v582 = vadd.f32 %v581, %v551
        %v583 = vrot.slane %v582, 4
        %v584 = vadd.f32 %v582, %v583
        %v585 = vrot.slane %v584, 2
        %v586 = vadd.f32 %v584, %v585
        %v587 = vrot.slane %v586, 1
        %v588 = vadd.f32 %v586, %v587
        %vm589 = vcmask 1040384
        %v590 = vsel %vm589, %v519, %v588
        %v591 = vld [vmem:[#allocation4] sm:$0x3]
        %v592 = vadd.f32 %v591, %v590
        %593 = vst [vmem:[#allocation4] sm:$0x3] %v592
        %s594 = sand.u32 %s74, 1
        %s595 = scalar_lea.sflag [#allocation3], %s594
        %s596 = sand.u32 %s74, 1
        %s597 = smul.addr %s596, 256
        %s598 = scalar_lea.vmem [#allocation2], %s597
        // Predicated region
        $region33: #{tpu_custom_call.1} parent=27 // pred_check
          %p599 = pneg %p84
        $region34: #{tpu_custom_call.1} parent=27 // pred_check_branch
          %601 = sbr.rel (%p599) target = $region36
        $region35: #{tpu_custom_call.1} parent=27 // pred_region
          %s602 = smul.u32 32, %s19
          %604 = vsyncadd %s595, 0
          %s605 = smul.addr %s602, 8
          %s606 = scalar_lea.hbm %s2, %s605
          %s607 = sshll.u32 %s598, 4
          %s608 = int_to_ptr.vmem [resolvable:$true] %s607
          %s609 = sshll.u32 %s606, 4
          %s610 = int_to_ptr.hbm [resolvable:$true] %s609
          %615 = dma.vmem_to_hbm [thread:$0]  %s608, 4096, %s610, %s595, 128, 128, 8
        $region36: #{tpu_custom_call.1} parent=27 // pred_fallthru
          _
        // Predicated region
        $region37: #{tpu_custom_call.1} parent=27 // pred_check
          %p616 = pneg %p105
        $region38: #{tpu_custom_call.1} parent=27 // pred_check_branch
          %618 = sbr.rel (%p616) target = $region40
        $region39: #{tpu_custom_call.1} parent=27 // pred_region
          %620 = vsyncadd [#allocation5], 0
          %s622 = sshll.u32 [#allocation4], 4
          %s623 = int_to_ptr.vmem [resolvable:$true] %s622
          %s624 = sshll.u32 %s3, 4
          %s625 = int_to_ptr.hbm [resolvable:$true] %s624
          %627 = dma.vmem_to_hbm [thread:$0]  %s623, 32, %s625, [#allocation5]
        $region40: #{tpu_custom_call.1} parent=27 // pred_fallthru
          _
        // Predicated region
        $region41: #{tpu_custom_call.1} parent=27 // pred_check
          %p628 = pneg %p105
        $region42: #{tpu_custom_call.1} parent=27 // pred_check_branch
          %630 = sbr.rel (%p628) target = $region44
        $region43: #{tpu_custom_call.1} parent=27 // pred_region
          %632 = dma.done [#allocation5], 32
        $region44: #{tpu_custom_call.1} parent=27 // pred_fallthru
          _
      $region28: #{tpu_custom_call.1} parent=5 // pred_fallthru
        _
      %p633 = scmp.le.s32.totalorder 2, %s14
      // Predicated region
      $region45: #{tpu_custom_call.1} parent=5 // pred_check
        %p634 = pneg %p633
      $region46: #{tpu_custom_call.1} parent=5 // pred_check_branch
        %636 = sbr.rel (%p634) target = $region48
      $region47: #{tpu_custom_call.1} parent=5 // pred_region
        %s637 = ssub.s32 %s14, 2
        // Predicated region
        $region49: #{tpu_custom_call.1} parent=47 // pred_check
          %p638 = pneg %p90
        $region50: #{tpu_custom_call.1} parent=47 // pred_check_branch
          %640 = sbr.rel (%p638) target = $region52
        $region51: #{tpu_custom_call.1} parent=47 // pred_region
          %s641 = sand.u32 %s75, 1
          %s642 = scalar_lea.sflag [#allocation3], %s641
          %s643 = sand.u32 %s75, 1
          %s644 = smul.addr %s643, 256
          %s645 = scalar_lea.vmem [#allocation2], %s644
          %647 = dma.done %s642, 4096
        $region52: #{tpu_custom_call.1} parent=47 // pred_fallthru
          _
      $region48: #{tpu_custom_call.1} parent=5 // pred_fallthru
        _
    $region6: #{tpu_custom_call.1} parent=1 // loop_footer
      %s18 = sadd.s32 1, %s14
    $region7: #{tpu_custom_call.1} parent=1 // loop_footer_branch
      %13 = sbr.rel target = $region3
    $region8: #{tpu_custom_call.1} parent=1 // loop_exit
      _
    %648 = vsyncpa [#allocation3], 1
    %s649 = scalar_lea.sflag [#allocation3], 1
    %650 = vsyncpa %s649, 1
    %651 = vsyncpa [#allocation5], 1

</llo_original>
